<compile_context>
chip_gen: v7x
topology: tpu7x:2x2x1
jax: 0.10.0
libtpu: 0.0.40
codegen_flags: <defaults>
</compile_context>

<pallas_src>
import functools

import jax
import jax.numpy as jnp
from jax.experimental import pallas as pl
from jax.experimental.pallas import tpu as pltpu


def _noisy_ce_kernel(logits_ref, targets_ref, out_ref, m_sc, l_sc, p_sc, *,
                     p_noisy, n_total):
    i = pl.program_id(0)          # batch-tile index ("parallel")
    kc = pl.program_id(1)         # class-tile index ("arbitrary", reduction)
    nc = pl.num_programs(1)

    @pl.when(kc == 0)
    def _():
        m_sc[...] = jnp.full_like(m_sc, -jnp.inf)
        l_sc[...] = jnp.zeros_like(l_sc)
        p_sc[...] = jnp.zeros_like(p_sc)

    raw = logits_ref[...]                          # (T, TC) native dtype
    lg = raw.astype(jnp.float32)                   # f32 only for exp/accum path
    t, c_blk = lg.shape

    tgt = targets_ref[...]                         # (T, 1) int32
    # (1, TC) iota broadcast against (T, 1) targets: no (T, TC) iota, no gather.
    class_ids = jax.lax.broadcasted_iota(jnp.int32, (1, c_blk), 1) + kc * c_blk
    mask = class_ids == tgt                        # (T, TC)

    # Online logsumexp update for this class block.
    blk_max = jnp.max(lg, axis=-1, keepdims=True)  # (T, 1)
    m_prev = m_sc[...]
    m_new = jnp.maximum(m_prev, blk_max)
    # At kc == 0, l == 0 so the exp(-inf) rescale factor is harmless.
    l_sc[...] = l_sc[...] * jnp.exp(m_prev - m_new) + jnp.sum(
        jnp.exp(lg - m_new), axis=-1, keepdims=True)
    m_sc[...] = m_new

    # Target logit picked in the native dtype (bf16 compare/select stays packed);
    # exactly one class matches across all blocks, so the running sum is exact.
    picked_blk = jnp.sum(jnp.where(mask, raw, jnp.zeros((), raw.dtype)),
                         axis=-1, keepdims=True).astype(jnp.float32)
    p_sc[...] += picked_blk

    @pl.when(kc == nc - 1)
    def _():
        losses = jnp.log(l_sc[...]) + m_sc[...] - p_sc[...]          # (T, 1)
        # Mask rows past the true batch size (garbage rows of a partial tile).
        row_ids = i * t + jax.lax.broadcasted_iota(jnp.int32, (t, 1), 0)
        contrib = jnp.where(row_ids < n_total, losses, 0.0)
        # weights == (1 - p) for in-range targets (see header note).
        partial = (1.0 - p_noisy) * jnp.sum(contrib)
        out_ref[...] = jnp.broadcast_to(partial, out_ref.shape).astype(jnp.float32)


def _round_up(x, m):
    return ((x + m - 1) // m) * m


def _cdiv(a, b):
    return (a + b - 1) // b


def _vmem_capacity_bytes():
    # Generation-aware budget (v5e/v6e: 128 MiB, v7x: 64 MiB); conservative
    # fallback if the query is unavailable.
    try:
        info = pltpu.get_tpu_info()
        cap = getattr(info, "vmem_capacity_bytes", None)
        if cap:
            return int(cap)
    except Exception:
        pass
    return 64 * 1024 * 1024


def _choose_tile_c(c, max_cols):
    """Largest multiple-of-128 divisor of c that is <= max_cols, else c."""
    if c <= max_cols or c % 128 != 0:
        return c
    d = (max_cols // 128) * 128
    while d >= 128:
        if c % d == 0:
            return d
        d -= 128
    return c


def noisy_cross_entropy_loss(logits, targets, p_noisy, tile_n=None, tile_c=None):
    """Pallas implementation of NoisyCrossEntropyLoss.forward.

    logits:  (N, C) float array (any float dtype; upcast to f32 inside the kernel)
    targets: (N,)   integer class indices in [0, C)
    returns: scalar float32 loss
    """
    n, c = logits.shape
    itemsize = jnp.dtype(logits.dtype).itemsize

    vmem_cap = _vmem_capacity_bytes()
    # Scoped limit: ~half of physical, never above 64 MiB (v5e/v6e -> 64 MiB,
    # v7x -> 32 MiB).
    vmem_limit = min(max(vmem_cap // 2, 16 * 1024 * 1024), 64 * 1024 * 1024)

    # --- class-axis tile -----------------------------------------------------
    if tile_c is None:
        # Bound the per-block width so (TILE_N, TILE_C) f32 temporaries stay
        # small even for LLM vocabularies; only tile when 128 | TILE_C | C.
        tile_c = _choose_tile_c(c, 16 * 1024)
    tile_c = int(tile_c)
    if c % tile_c != 0 or (tile_c != c and tile_c % 128 != 0):
        tile_c = c
    num_c = c // tile_c

    # --- batch-axis tile (sized from the real resident footprint) -----------
    # double-buffered native-dtype input  +  ~5x f32 (T, TC) temporaries
    bytes_per_elem_resident = 2 * itemsize + 5 * 4
    budget = int(0.7 * vmem_limit)
    auto_tile_n = tile_n is None
    if auto_tile_n:
        rows = budget // max(1, tile_c * bytes_per_elem_resident)
        # Cap the raw logits buffer at ~8 MiB (HBM-roofline plateau).
        rows = min(rows, (8 * 1024 * 1024) // max(1, tile_c * itemsize))
        rows = max(8, (rows // 8) * 8)
        tile_n = int(min(rows, _round_up(n, 8)))
    tile_n = max(8, _round_up(int(tile_n), 8))

    num_n = _cdiv(n, tile_n)
    if auto_tile_n and num_n == 1 and n >= 16:
        # v7x has 2 TensorCores: make sure the "parallel" axis has >= 2 tiles.
        tile_n = max(8, _round_up(_cdiv(n, 2), 8))
        num_n = _cdiv(n, tile_n)

    targets_2d = targets.astype(jnp.int32).reshape(n, 1)

    cost = pl.CostEstimate(
        flops=8 * n * c,
        transcendentals=n * c,                       # one EUP exp per element
        bytes_accessed=n * c * itemsize + n * 4 * num_c + num_n * 128 * 4,
    )

    partials = pl.pallas_call(
        functools.partial(_noisy_ce_kernel, p_noisy=float(p_noisy), n_total=n),
        out_shape=jax.ShapeDtypeStruct((num_n, 1, 128), jnp.float32),
        grid_spec=pltpu.PrefetchScalarGridSpec(
            num_scalar_prefetch=0,
            grid=(num_n, num_c),
            in_specs=[
                pl.BlockSpec((tile_n, tile_c), lambda i, kc: (i, kc)),  # logits
                pl.BlockSpec((tile_n, 1), lambda i, kc: (i, 0)),        # targets
            ],
            out_specs=pl.BlockSpec((1, 1, 128), lambda i, kc: (i, 0, 0)),
            scratch_shapes=[pltpu.VMEM((tile_n, 1), jnp.float32)] * 3,
        ),
        compiler_params=pltpu.CompilerParams(
            dimension_semantics=("parallel", "arbitrary"),
            vmem_limit_bytes=vmem_limit,
        ),
        cost_estimate=cost,
    )(logits, targets_2d)

    # Tiny final reduction in plain JAX.
    return jnp.sum(partials[:, 0, 0]) / n


def _reference_loss(logits, targets, p_noisy):
    """Pure-JAX reference (mirrors the PyTorch module exactly)."""
    logits = logits.astype(jnp.float32)
    logz = jax.scipy.special.logsumexp(logits, axis=1)
    picked = jnp.take_along_axis(
        logits, targets[:, None].astype(jnp.int32), axis=1)[:, 0]
    losses = logz - picked
    onehot_sum = jax.nn.one_hot(targets, logits.shape[1], dtype=jnp.float32).sum(axis=1)
    weights = 1.0 - p_noisy + p_noisy * (1.0 - onehot_sum)
    return jnp.mean(losses * weights)


if __name__ == "__main__":
    P_NOISY = 0.1
    key = jax.random.PRNGKey(0)
    ks = jax.random.split(key, 8)

    # Case 1: small aligned shapes (batch=8, classes=32), single tile.
    logits_a = jax.random.normal(ks[0], (8, 32), dtype=jnp.float32)
    targets_a = jax.random.randint(ks[1], (8,), 0, 32, dtype=jnp.int32)
    loss_a = jax.block_until_ready(noisy_cross_entropy_loss(logits_a, targets_a, P_NOISY))
    ref_a = jax.block_until_ready(_reference_loss(logits_a, targets_a, P_NOISY))
    assert jnp.allclose(loss_a, ref_a, rtol=1e-5, atol=1e-5), (loss_a, ref_a)

    # Case 2: unaligned batch (N=20), bf16 logits, forced small tile -> several
    # grid steps plus a masked partial last tile; bf16 pick path exercised.
    logits_b = jax.random.normal(ks[2], (20, 64), dtype=jnp.float32).astype(jnp.bfloat16)
    targets_b = jax.random.randint(ks[3], (20,), 0, 64, dtype=jnp.int32)
    loss_b = jax.block_until_ready(
        noisy_cross_entropy_loss(logits_b, targets_b, P_NOISY, tile_n=8))
    ref_b = jax.block_until_ready(
        _reference_loss(logits_b.astype(jnp.float32), targets_b, P_NOISY))
    assert jnp.allclose(loss_b, ref_b, rtol=2e-2, atol=2e-2), (loss_b, ref_b)

    # Case 3: class-axis tiling (C=256, TILE_C=128) -> online logsumexp path.
    logits_c = jax.random.normal(ks[4], (24, 256), dtype=jnp.float32)
    targets_c = jax.random.randint(ks[5], (24,), 0, 256, dtype=jnp.int32)
    loss_c = jax.block_until_ready(
        noisy_cross_entropy_loss(logits_c, targets_c, P_NOISY, tile_n=8, tile_c=128))
    ref_c = jax.block_until_ready(_reference_loss(logits_c, targets_c, P_NOISY))
    assert jnp.allclose(loss_c, ref_c, rtol=1e-5, atol=1e-5), (loss_c, ref_c)

    # Case 4: C not a multiple of 128 (lane padding must not leak into sums);
    # also exercises the auto split into 2 batch tiles for the 2-TC case.
    logits_d = jax.random.normal(ks[6], (16, 1000), dtype=jnp.float32)
    targets_d = jax.random.randint(ks[7], (16,), 0, 1000, dtype=jnp.int32)
    loss_d = jax.block_until_ready(noisy_cross_entropy_loss(logits_d, targets_d, P_NOISY))
    ref_d = jax.block_until_ready(_reference_loss(logits_d, targets_d, P_NOISY))
    assert jnp.allclose(loss_d, ref_d, rtol=1e-5, atol=1e-5), (loss_d, ref_d)

    print("KERNEL_OK")
</pallas_src>

<mosaic_0001>
module attributes {stable_mosaic.version = 11 : i64} {
  func.func @_noisy_ce_kernel(%arg0: i32, %arg1: i32, %arg2: memref<8x32xf32, #tpu.memory_space<vmem>>, %arg3: memref<8x1xi32, #tpu.memory_space<vmem>>, %arg4: memref<1x1x128xf32, #tpu.memory_space<vmem>>, %arg5: memref<8x1xf32, #tpu.memory_space<vmem>>, %arg6: memref<8x1xf32, #tpu.memory_space<vmem>>, %arg7: memref<8x1xf32, #tpu.memory_space<vmem>>) attributes {dimension_semantics = [#tpu.dimension_semantics<parallel>, #tpu.dimension_semantics<arbitrary>], iteration_bounds = array<i64: 1, 1>, scalar_prefetch = 0 : i64, scratch_operands = 3 : i64, tpu.core_type = #tpu.core_type<tc>, window_params = [{transform_indices = @transform_0, window_bounds = array<i64: 8, 32>}, {transform_indices = @transform_1, window_bounds = array<i64: 8, 1>}, {transform_indices = @transform_2, window_bounds = array<i64: 1, 1, 128>}]} {
    %c0_i32 = arith.constant 0 : i32
    %0 = arith.cmpi eq, %arg1, %c0_i32 : i32
    %1 = arith.extui %0 : i1 to i32
    %c0_i32_0 = arith.constant 0 : i32
    %2 = arith.cmpi ne, %1, %c0_i32_0 : i32
    scf.if %2 {
      %cst_21 = arith.constant 0xFF800000 : f32
      %38 = vector.broadcast %cst_21 : f32 to vector<8x1xf32>
      %c0_22 = arith.constant 0 : index
      %c0_23 = arith.constant 0 : index
      %39 = vector.load %arg5[%c0_22, %c0_23] : memref<8x1xf32, #tpu.memory_space<vmem>>, vector<8x1xf32>
      tpu.vector_store %arg5[%c0_22, %c0_23], %38 {strides = array<i32>} : memref<8x1xf32, #tpu.memory_space<vmem>>, vector<8x1xf32>,
      %cst_24 = arith.constant 0.000000e+00 : f32
      %40 = vector.broadcast %cst_24 : f32 to vector<8x1xf32>
      %c0_25 = arith.constant 0 : index
      %c0_26 = arith.constant 0 : index
      %41 = vector.load %arg6[%c0_25, %c0_26] : memref<8x1xf32, #tpu.memory_space<vmem>>, vector<8x1xf32>
      tpu.vector_store %arg6[%c0_25, %c0_26], %40 {strides = array<i32>} : memref<8x1xf32, #tpu.memory_space<vmem>>, vector<8x1xf32>,
      %cst_27 = arith.constant 0.000000e+00 : f32
      %42 = vector.broadcast %cst_27 : f32 to vector<8x1xf32>
      %c0_28 = arith.constant 0 : index
      %c0_29 = arith.constant 0 : index
      %43 = vector.load %arg7[%c0_28, %c0_29] : memref<8x1xf32, #tpu.memory_space<vmem>>, vector<8x1xf32>
      tpu.vector_store %arg7[%c0_28, %c0_29], %42 {strides = array<i32>} : memref<8x1xf32, #tpu.memory_space<vmem>>, vector<8x1xf32>,
    } else {
    }
    %c0 = arith.constant 0 : index
    %c0_1 = arith.constant 0 : index
    %3 = vector.load %arg2[%c0, %c0_1] : memref<8x32xf32, #tpu.memory_space<vmem>>, vector<8x32xf32>
    %c0_2 = arith.constant 0 : index
    %c0_3 = arith.constant 0 : index
    %4 = vector.load %arg3[%c0_2, %c0_3] : memref<8x1xi32, #tpu.memory_space<vmem>>, vector<8x1xi32>
    %5 = tpu.iota {dimensions = array<i32: 1>} : vector<1x32xi32>
    %c32_i32 = arith.constant 32 : i32
    %6 = arith.muli %arg1, %c32_i32 : i32
    %7 = vector.broadcast %6 : i32 to vector<1x32xi32>
    %8 = arith.addi %5, %7 : vector<1x32xi32>
    %9 = vector.broadcast %8 : vector<1x32xi32> to vector<8x32xi32>
    %10 = vector.broadcast %4 : vector<8x1xi32> to vector<8x32xi32>
    %11 = arith.cmpi eq, %9, %10 : vector<8x32xi32>
    %cst = arith.constant dense<0xFF800000> : vector<8xf32>
    %12 = vector.multi_reduction <maximumf>, %3, %cst [1] : vector<8x32xf32> to vector<8xf32>
    %13 = vector.shape_cast %12 : vector<8xf32> to vector<8x1xf32>
    %c0_4 = arith.constant 0 : index
    %c0_5 = arith.constant 0 : index
    %14 = vector.load %arg5[%c0_4, %c0_5] : memref<8x1xf32, #tpu.memory_space<vmem>>, vector<8x1xf32>
    %15 = arith.maximumf %14, %13 : vector<8x1xf32>
    %c0_6 = arith.constant 0 : index
    %c0_7 = arith.constant 0 : index
    %16 = vector.load %arg6[%c0_6, %c0_7] : memref<8x1xf32, #tpu.memory_space<vmem>>, vector<8x1xf32>
    %17 = arith.subf %14, %15 : vector<8x1xf32>
    %18 = math.exp %17 : vector<8x1xf32>
    %19 = arith.mulf %16, %18 : vector<8x1xf32>
    %20 = vector.broadcast %15 : vector<8x1xf32> to vector<8x32xf32>
    %21 = arith.subf %3, %20 : vector<8x32xf32>
    %22 = math.exp %21 : vector<8x32xf32>
    %cst_8 = arith.constant dense<0.000000e+00> : vector<8xf32>
    %23 = vector.multi_reduction <add>, %22, %cst_8 [1] : vector<8x32xf32> to vector<8xf32>
    %24 = vector.shape_cast %23 : vector<8xf32> to vector<8x1xf32>
    %25 = arith.addf %19, %24 : vector<8x1xf32>
    %c0_9 = arith.constant 0 : index
    %c0_10 = arith.constant 0 : index
    %26 = vector.load %arg6[%c0_9, %c0_10] : memref<8x1xf32, #tpu.memory_space<vmem>>, vector<8x1xf32>
    tpu.vector_store %arg6[%c0_9, %c0_10], %25 {strides = array<i32>} : memref<8x1xf32, #tpu.memory_space<vmem>>, vector<8x1xf32>,
    %c0_11 = arith.constant 0 : index
    %c0_12 = arith.constant 0 : index
    %27 = vector.load %arg5[%c0_11, %c0_12] : memref<8x1xf32, #tpu.memory_space<vmem>>, vector<8x1xf32>
    tpu.vector_store %arg5[%c0_11, %c0_12], %15 {strides = array<i32>} : memref<8x1xf32, #tpu.memory_space<vmem>>, vector<8x1xf32>,
    %cst_13 = arith.constant 0.000000e+00 : f32
    %28 = vector.broadcast %cst_13 : f32 to vector<8x32xf32>
    %29 = arith.select %11, %3, %28 : vector<8x32xi1>, vector<8x32xf32>
    %cst_14 = arith.constant dense<0.000000e+00> : vector<8xf32>
    %30 = vector.multi_reduction <add>, %29, %cst_14 [1] : vector<8x32xf32> to vector<8xf32>
    %31 = vector.shape_cast %30 : vector<8xf32> to vector<8x1xf32>
    %c0_15 = arith.constant 0 : index
    %c0_16 = arith.constant 0 : index
    %32 = vector.load %arg7[%c0_15, %c0_16] : memref<8x1xf32, #tpu.memory_space<vmem>>, vector<8x1xf32>
    %33 = arith.addf %32, %31 : vector<8x1xf32>
    %c0_17 = arith.constant 0 : index
    %c0_18 = arith.constant 0 : index
    %34 = vector.load %arg7[%c0_17, %c0_18] : memref<8x1xf32, #tpu.memory_space<vmem>>, vector<8x1xf32>
    tpu.vector_store %arg7[%c0_17, %c0_18], %33 {strides = array<i32>} : memref<8x1xf32, #tpu.memory_space<vmem>>, vector<8x1xf32>,
    %c0_i32_19 = arith.constant 0 : i32
    %35 = arith.cmpi eq, %arg1, %c0_i32_19 : i32
    %36 = arith.extui %35 : i1 to i32
    %c0_i32_20 = arith.constant 0 : i32
    %37 = arith.cmpi ne, %36, %c0_i32_20 : i32
    scf.if %37 {
      %c0_21 = arith.constant 0 : index
      %c0_22 = arith.constant 0 : index
      %38 = vector.load %arg6[%c0_21, %c0_22] : memref<8x1xf32, #tpu.memory_space<vmem>>, vector<8x1xf32>
      %39 = math.log %38 : vector<8x1xf32>
      %c0_23 = arith.constant 0 : index
      %c0_24 = arith.constant 0 : index
      %40 = vector.load %arg5[%c0_23, %c0_24] : memref<8x1xf32, #tpu.memory_space<vmem>>, vector<8x1xf32>
      %41 = arith.addf %39, %40 : vector<8x1xf32>
      %c0_25 = arith.constant 0 : index
      %c0_26 = arith.constant 0 : index
      %42 = vector.load %arg7[%c0_25, %c0_26] : memref<8x1xf32, #tpu.memory_space<vmem>>, vector<8x1xf32>
      %43 = arith.subf %41, %42 : vector<8x1xf32>
      %c8_i32 = arith.constant 8 : i32
      %44 = arith.muli %arg0, %c8_i32 : i32
      %45 = tpu.iota {dimensions = array<i32: 0>} : vector<8x1xi32>
      %46 = vector.broadcast %44 : i32 to vector<8x1xi32>
      %47 = arith.addi %46, %45 : vector<8x1xi32>
      %c8_i32_27 = arith.constant 8 : i32
      %48 = vector.broadcast %c8_i32_27 : i32 to vector<8x1xi32>
      %49 = arith.cmpi slt, %47, %48 : vector<8x1xi32>
      %cst_28 = arith.constant 0.000000e+00 : f32
      %50 = vector.broadcast %cst_28 : f32 to vector<8x1xf32>
      %51 = arith.select %49, %43, %50 : vector<8x1xi1>, vector<8x1xf32>
      %52 = vector.shape_cast %51 : vector<8x1xf32> to vector<1x8x1xf32>
      %cst_29 = arith.constant dense<0.000000e+00> : vector<1xf32>
      %53 = vector.multi_reduction <add>, %52, %cst_29 [1, 2] : vector<1x8x1xf32> to vector<1xf32>
      %54 = vector.shape_cast %53 : vector<1xf32> to vector<1x1x1xf32>
      %55 = vector.extract %54[0, 0, 0] : f32 from vector<1x1x1xf32>
      %cst_30 = arith.constant 0.899999976 : f32
      %56 = arith.mulf %cst_30, %55 : f32
      %57 = vector.broadcast %56 : f32 to vector<1x1x128xf32>
      %c0_31 = arith.constant 0 : index
      %c0_32 = arith.constant 0 : index
      %c0_33 = arith.constant 0 : index
      %58 = vector.load %arg4[%c0_31, %c0_32, %c0_33] : memref<1x1x128xf32, #tpu.memory_space<vmem>>, vector<1x1x128xf32>
      tpu.vector_store %arg4[%c0_31, %c0_32, %c0_33], %57 {strides = array<i32>} : memref<1x1x128xf32, #tpu.memory_space<vmem>>, vector<1x1x128xf32>,
    } else {
    }
    return
  }
  func.func @transform_0(%arg0: i32, %arg1: i32) -> (i32, i32) {
    %c0_i32 = arith.constant 0 : i32
    return %arg0, %arg1 : i32, i32
  }
  func.func @transform_1(%arg0: i32, %arg1: i32) -> (i32, i32) {
    %c0_i32 = arith.constant 0 : i32
    %c0_i32_0 = arith.constant 0 : i32
    return %arg0, %c0_i32 : i32, i32
  }
  func.func @transform_2(%arg0: i32, %arg1: i32) -> (i32, i32, i32) {
    %c0_i32 = arith.constant 0 : i32
    %c0_i32_0 = arith.constant 0 : i32
    %c0_i32_1 = arith.constant 0 : i32
    return %arg0, %c0_i32, %c0_i32_0 : i32, i32, i32
  }
}

</mosaic_0001>

<llo_original>
// kernel: tpu_custom_call.1
$region0: #{tpu_custom_call.1}
  #allocation0 [shape = 'u32[]', space=smem, size = 0x4, offset = 0x4, fixed_abs, tag = 'smem constant byte address 0x4 - core index']
  #allocation1 [shape = 'u32[144,128]{1,0:T(1,128)}', space=vmem, size = 0x12000, scoped, tag = 'internal scratch']
  #allocation2 [shape = 'f32[8,1]{1,0:T(8,128)}', space=vmem, size = 0x1000, scoped, tag = 'scratch operand']
  #allocation3 [shape = 'f32[8,1]{1,0:T(8,128)}', space=vmem, size = 0x1000, scoped, tag = 'scratch operand']
  #allocation4 [shape = 'f32[8,1]{1,0:T(8,128)}', space=vmem, size = 0x1000, scoped, tag = 'scratch operand']
  %s0 = inlined_call_operand.vmem [shape: f32[8,32], index: 0, kind: input, shape index: {}]
  %s1 = inlined_call_operand.vmem [shape: s32[8,1], index: 1, kind: input, shape index: {}]
  %s2 = inlined_call_operand.hbm [shape: f32[1,1,128], index: 2, kind: output, shape index: {}]
  %s3 = sld [smem:[#allocation0]]
  $region26: #{tpu_custom_call.1} parent=0
    _
  %s5 = ssub.s32 1, %s3
  %s6 = scalar_select 0, %s5, %s3
  $region1: #{tpu_custom_call.1} parent=0
    #allocation5 [shape = 'u8[512]{0}', space=vmem, size = 0x400, scoped, tag = 'output window, operand 0, single buffered']
    #allocation6 [shape = 's32[1]{0}', space=sflag, size = 0x4, scoped, tag = 'scoped memory for tpu_custom_call.1']
    %7 = vsyncpa [#allocation6], 0
    // Predicated region
    $region2: #{tpu_custom_call.1} parent=1 // pred_check
      _
    $region3: #{tpu_custom_call.1} parent=1 // pred_check_branch
      %9 = sbr.rel (0) target = $region5
    $region4: #{tpu_custom_call.1} parent=1 // pred_region
      _
    $region5: #{tpu_custom_call.1} parent=1 // pred_fallthru
      _
    // Predicated region
    $region6: #{tpu_custom_call.1} parent=1 // pred_check
      _
    $region7: #{tpu_custom_call.1} parent=1 // pred_check_branch
      %11 = sbr.rel (0) target = $region9
    $region8: #{tpu_custom_call.1} parent=1 // pred_region
      _
    $region9: #{tpu_custom_call.1} parent=1 // pred_fallthru
      _
    %p12 = scmp.eq.s32.totalorder 0, 0
    // Predicated region
    $region10: #{tpu_custom_call.1} parent=1 // pred_check
      %p13 = pneg %p12
    $region11: #{tpu_custom_call.1} parent=1 // pred_check_branch
      %15 = sbr.rel (%p13) target = $region13
    $region12: #{tpu_custom_call.1} parent=1 // pred_region
      %vm16 = vcmask 7168
      %17 = vst.msk [vmem:[#allocation2] sm:$0xff] %vm16, -inf
      %18 = vst.msk [vmem:[#allocation3] sm:$0xff] %vm16, 0.0
      %19 = vst.msk [vmem:[#allocation4] sm:$0xff] %vm16, 0.0
    $region13: #{tpu_custom_call.1} parent=1 // pred_fallthru
      _
    %v20 = vld [vmem:[%s0] sm:$0xff]
    %v21 = vld [vmem:[%s1] sm:$0xff]
    %v22 = vlaneseq
    %v23 = vand.u32 %v22, 127
    %s24 = smul.u32 0, 32
    %v25 = vstv %s24
    %v26 = vadd.s32 %v23, %v25
    %27 = vset.pattern.permute.xlu0 0
    %28 = vperm.xlu0 %27, %v21
    %v29 = vpop.permute.xlu0 %28
    %vm30 = vcmp.eq.s32.totalorder %v26, %v29
    %vm31 = vcmask 261120
    %v32 = vsel %vm31, %v20, -inf
    %33 = vmax.xlane.f32.xlu0 %v32
    %v34 = vpop.xlane.xlu0 %33
    %v35 = vld [vmem:[#allocation2] sm:$0xff]
    %v36 = vmax.f32 %v35, %v34
    %v37 = vld [vmem:[#allocation3] sm:$0xff]
    %v38 = vsub.f32 %v35, %v36
    %v39 = vmul.f32 %v38, 1.442695
    %v40 = vpow.pop %v39
    %v41 = vmul.f32 %v37, %v40
    %43 = vset.pattern.permute.xlu0 0
    %44 = vperm.xlu0 %43, %v36
    %v45 = vpop.permute.xlu0 %44
    %v47 = vsub.f32 %v20, %v45
    %v48 = vmul.f32 %v47, 1.442695
    %v49 = vpow.pop %v48
    %v50 = vsel %vm31, %v49, 0.0
    %51 = vadd.xlane.f32.xlu0 %v50
    %v52 = vpop.xlane.xlu0 %51
    %v53 = vadd.f32 %v41, %v52
    %vm54 = vcmask 7168
    %55 = vst.msk [vmem:[#allocation3] sm:$0xff] %vm54, %v53
    %56 = vst.msk [vmem:[#allocation2] sm:$0xff] %vm54, %v36
    %v57 = vsel %vm30, %v20, 0.0
    %v58 = vsel %vm31, %v57, 0.0
    %59 = vadd.xlane.f32.xlu0 %v58
    %v60 = vpop.xlane.xlu0 %59
    %v61 = vld [vmem:[#allocation4] sm:$0xff]
    %v62 = vadd.f32 %v61, %v60
    %63 = vst.msk [vmem:[#allocation4] sm:$0xff] %vm54, %v62
    // Predicated region
    $region14: #{tpu_custom_call.1} parent=1 // pred_check
      %p64 = pneg %p12
    $region15: #{tpu_custom_call.1} parent=1 // pred_check_branch
      %66 = sbr.rel (%p64) target = $region17
    $region16: #{tpu_custom_call.1} parent=1 // pred_region
      %v67 = vld [vmem:[#allocation3] sm:$0xff]
      %v68 = vlog2.pop %v67
      %v69 = vmul.f32 %v68, 0.6931472
      %v70 = vld [vmem:[#allocation2] sm:$0xff]
      %v71 = vadd.f32 %v69, %v70
      %v72 = vld [vmem:[#allocation4] sm:$0xff]
      %v73 = vsub.f32 %v71, %v72
      %s74 = smul.u32 0, 8
      %v75 = vlaneseq
      %v76 = vshrl.u32 %v75, 7
      %v77 = vstv %s74
      %v78 = vadd.s32 %v77, %v76
      %vm79 = vcmp.lt.s32.totalorder %v78, 8
      %v80 = vsel %vm79, %v73, 0.0
      %v81 = vsel %vm54, %v80, 0.0
      %82 = vadd.xlane.f32.xlu0 %v81
      %v83 = vpop.xlane.xlu0 %82
      %v84 = vrot.slane %v83, 4
      %v85 = vadd.f32 %v83, %v84
      %v86 = vrot.slane %v85, 2
      %v87 = vadd.f32 %v85, %v86
      %v88 = vrot.slane %v87, 1
      %v89 = vadd.f32 %v87, %v88
      %s90 = vtos %v89
      %s91 = smul.f32 %s90, 0.9
      %v92 = vstv %s91
      %93 = vst [vmem:[#allocation5] sm:$0x1] %v92
    $region17: #{tpu_custom_call.1} parent=1 // pred_fallthru
      _
    // Predicated region
    $region18: #{tpu_custom_call.1} parent=1 // pred_check
      _
    $region19: #{tpu_custom_call.1} parent=1 // pred_check_branch
      %95 = sbr.rel (0) target = $region21
    $region20: #{tpu_custom_call.1} parent=1 // pred_region
      %s97 = ssub.s32 16, 16
      %98 = vsyncadd [#allocation6], %s97
      %s100 = sshll.u32 [#allocation5], 4
      %s101 = int_to_ptr.vmem [resolvable:$true] %s100
      %103 = dma.vmem_to_hbm [thread:$0]  %s101, 16, %s2, [#allocation6]
    $region21: #{tpu_custom_call.1} parent=1 // pred_fallthru
      _
    // Predicated region
    $region22: #{tpu_custom_call.1} parent=1 // pred_check
      _
    $region23: #{tpu_custom_call.1} parent=1 // pred_check_branch
      %105 = sbr.rel (0) target = $region25
    $region24: #{tpu_custom_call.1} parent=1 // pred_region
      %106 = dma.done [#allocation6], 16
    $region25: #{tpu_custom_call.1} parent=1 // pred_fallthru
      _
    %107 = vsyncpa [#allocation6], 1

</llo_original>
